<compile_context>
chip_gen: v7x
topology: tpu7x:2x2x1
jax: 0.10.0
libtpu: 0.0.40
codegen_flags: <defaults>
</compile_context>

<pallas_src>
import jax
import jax.numpy as jnp
from jax.experimental import pallas as pl
from jax.experimental.pallas import tpu as pltpu


def mlp_kernel(x_ref, w1_ref, b1_ref, w2_ref, b2_ref, o_ref):
    # First linear + ReLU (MXU matmul with f32 accumulation, VPU elementwise).
    h = jnp.dot(x_ref[...], w1_ref[...], preferred_element_type=jnp.float32)
    h = jnp.maximum(h + b1_ref[...], 0.0)             # (B,H) + (1,H), ReLU
    # Second linear (out_features == 1) as VPU multiply + XLU lane reduce.
    z = jnp.sum(h * w2_ref[...], axis=-1, keepdims=True) + b2_ref[...]
    o_ref[...] = jax.nn.sigmoid(z)                    # torch.sigmoid
    # NOTE: the reference forward mentions torch.softmax / torch.tanh but
    # never calls them, so they are intentionally not computed here.


def _round_up(n, m):
    return ((n + m - 1) // m) * m


def _default_block_batch():
    """Per-generation batch-tile cap driven by default scoped VMEM."""
    try:
        kind = jax.devices()[0].device_kind.lower()
    except Exception:
        return 4096
    if "v6" in kind or "v7" in kind:
        return 8192          # 32 MiB default scoped VMEM -> ~20 MiB of tiles
    return 4096              # v5e (16 MiB scoped) and anything unknown


def neural_net_forward(x, w1, b1, w2_row, b2, *,
                       block_batch=None, single_call_threshold=4096):
    """x: (B, input_size); w1: (in, hidden); b1: (1, hidden);
    w2_row: (1, hidden); b2: (1, 1). Returns (B, 1) float32."""
    B, D = x.shape
    H = w1.shape[1]
    if block_batch is None:
        block_batch = _default_block_batch()

    if B <= single_call_threshold:
        # Small/medium batch: single invocation, whole arrays in VMEM,
        # no grid, no pipeline machinery, no padding.
        return pl.pallas_call(
            mlp_kernel,
            out_shape=jax.ShapeDtypeStruct((B, 1), jnp.float32),
            in_specs=[pl.BlockSpec(memory_space=pltpu.MemorySpace.VMEM)] * 5,
            out_specs=pl.BlockSpec(memory_space=pltpu.MemorySpace.VMEM),
        )(x, w1, b1, w2_row, b2)

    # Batch-tiled path: TB rows per grid step, weights VMEM-resident.
    # Keep >= 2 grid blocks so v7x's two TensorCores both get work and the
    # x DMA pipelines; cap TB per chip generation for scoped-VMEM headroom.
    TB = min(block_batch, _round_up(pl.cdiv(B, 2), 8))
    TB = max(8, _round_up(TB, 8))            # f32 sublane multiple
    n_blocks = pl.cdiv(B, TB)

    # No padding: Pallas masks the out-of-range tail of the last block.
    return pl.pallas_call(
        mlp_kernel,
        out_shape=jax.ShapeDtypeStruct((B, 1), jnp.float32),
        grid=(n_blocks,),
        in_specs=[
            pl.BlockSpec((TB, D), lambda i: (i, 0)),   # x: tiled over batch
            pl.BlockSpec((D, H), lambda i: (0, 0)),    # w1: resident
            pl.BlockSpec((1, H), lambda i: (0, 0)),    # b1: resident
            pl.BlockSpec((1, H), lambda i: (0, 0)),    # w2 row: resident
            pl.BlockSpec((1, 1), lambda i: (0, 0)),    # b2: resident
        ],
        out_specs=pl.BlockSpec((TB, 1), lambda i: (i, 0)),
        compiler_params=pltpu.CompilerParams(
            dimension_semantics=("parallel",),          # megacore on v7x
        ),
    )(x, w1, b1, w2_row, b2)


def reference_forward(x, w1, b1, w2_row, b2):
    h = jnp.maximum(x @ w1 + b1, 0.0)
    return jax.nn.sigmoid(h @ w2_row.T + b2)


if __name__ == "__main__":
    input_size = 16
    hidden_size = 32

    key = jax.random.PRNGKey(0)
    kx, kw1, kb1, kw2, kb2, kx2 = jax.random.split(key, 6)

    # Deterministic synthetic parameters (shapes from the module's __init__).
    # linear1: Linear(input_size, hidden_size) -> W1 stored (in, out), b1 (1, out)
    w1 = jax.random.normal(kw1, (input_size, hidden_size), jnp.float32) * 0.1
    b1 = jax.random.normal(kb1, (1, hidden_size), jnp.float32) * 0.1
    # linear2: Linear(hidden_size, 1) -> PyTorch-native (1, hidden) row + (1,1) bias
    w2 = jax.random.normal(kw2, (1, hidden_size), jnp.float32) * 0.1
    b2 = jax.random.normal(kb2, (1, 1), jnp.float32) * 0.1

    # --- Small batch: no-grid path -----------------------------------------
    batch = 8
    x = jax.random.normal(kx, (batch, input_size), dtype=jnp.float32)
    out = jax.block_until_ready(neural_net_forward(x, w1, b1, w2, b2))
    ref = reference_forward(x, w1, b1, w2, b2)
    assert out.shape == (batch, 1), out.shape
    assert jnp.allclose(out, ref, atol=1e-5, rtol=1e-5), "small-path mismatch"

    # --- Larger batch: tiled path (grid + unpadded OOB tail block) ---------
    big_batch = 300   # not a multiple of the tile -> exercises masked tail
    x_big = jax.random.normal(kx2, (big_batch, input_size), dtype=jnp.float32)
    out_big = jax.block_until_ready(
        neural_net_forward(x_big, w1, b1, w2, b2,
                           block_batch=128, single_call_threshold=64))
    ref_big = reference_forward(x_big, w1, b1, w2, b2)
    assert out_big.shape == (big_batch, 1), out_big.shape
    assert jnp.allclose(out_big, ref_big, atol=1e-5, rtol=1e-5), "tiled-path mismatch"

    print("KERNEL_OK")
</pallas_src>

<mosaic_0001>
module attributes {stable_mosaic.version = 11 : i64} {
  func.func @mlp_kernel(%arg0: memref<8x16xf32, #tpu.memory_space<vmem>>, %arg1: memref<16x32xf32, #tpu.memory_space<vmem>>, %arg2: memref<1x32xf32, #tpu.memory_space<vmem>>, %arg3: memref<1x32xf32, #tpu.memory_space<vmem>>, %arg4: memref<1x1xf32, #tpu.memory_space<vmem>>, %arg5: memref<8x1xf32, #tpu.memory_space<vmem>>) attributes {dimension_semantics = [], scalar_prefetch = 0 : i64, scratch_operands = 0 : i64, tpu.core_type = #tpu.core_type<tc>} {
    %c0 = arith.constant 0 : index
    %c0_0 = arith.constant 0 : index
    %0 = vector.load %arg0[%c0, %c0_0] : memref<8x16xf32, #tpu.memory_space<vmem>>, vector<8x16xf32>
    %c0_1 = arith.constant 0 : index
    %c0_2 = arith.constant 0 : index
    %1 = vector.load %arg1[%c0_1, %c0_2] : memref<16x32xf32, #tpu.memory_space<vmem>>, vector<16x32xf32>
    %cst = arith.constant dense<0.000000e+00> : vector<8x32xf32>
    %2 = tpu.matmul %0, %1, %cst {dimension_numbers = #tpu.dot_dimension_numbers<[1], [0], [0], [1], [0, 0, 1, 1], [], []>} : vector<8x16xf32>, vector<16x32xf32>, vector<8x32xf32> -> vector<8x32xf32>
    %c0_3 = arith.constant 0 : index
    %c0_4 = arith.constant 0 : index
    %3 = vector.load %arg2[%c0_3, %c0_4] : memref<1x32xf32, #tpu.memory_space<vmem>>, vector<1x32xf32>
    %4 = vector.broadcast %3 : vector<1x32xf32> to vector<8x32xf32>
    %5 = arith.addf %2, %4 : vector<8x32xf32>
    %cst_5 = arith.constant 0.000000e+00 : f32
    %6 = vector.broadcast %cst_5 : f32 to vector<8x32xf32>
    %7 = arith.maximumf %5, %6 : vector<8x32xf32>
    %c0_6 = arith.constant 0 : index
    %c0_7 = arith.constant 0 : index
    %8 = vector.load %arg3[%c0_6, %c0_7] : memref<1x32xf32, #tpu.memory_space<vmem>>, vector<1x32xf32>
    %9 = vector.broadcast %8 : vector<1x32xf32> to vector<8x32xf32>
    %10 = arith.mulf %7, %9 : vector<8x32xf32>
    %cst_8 = arith.constant dense<0.000000e+00> : vector<8xf32>
    %11 = vector.multi_reduction <add>, %10, %cst_8 [1] : vector<8x32xf32> to vector<8xf32>
    %12 = vector.shape_cast %11 : vector<8xf32> to vector<8x1xf32>
    %c0_9 = arith.constant 0 : index
    %c0_10 = arith.constant 0 : index
    %13 = vector.load %arg4[%c0_9, %c0_10] : memref<1x1xf32, #tpu.memory_space<vmem>>, vector<1x1xf32>
    %14 = vector.broadcast %13 : vector<1x1xf32> to vector<8x1xf32>
    %15 = arith.addf %12, %14 : vector<8x1xf32>
    %16 = arith.negf %15 : vector<8x1xf32>
    %17 = math.exp %16 : vector<8x1xf32>
    %cst_11 = arith.constant 1.000000e+00 : f32
    %18 = vector.broadcast %cst_11 : f32 to vector<8x1xf32>
    %19 = arith.addf %18, %17 : vector<8x1xf32>
    %20 = arith.divf %18, %19 : vector<8x1xf32>
    %c0_12 = arith.constant 0 : index
    %c0_13 = arith.constant 0 : index
    %21 = vector.load %arg5[%c0_12, %c0_13] : memref<8x1xf32, #tpu.memory_space<vmem>>, vector<8x1xf32>
    tpu.vector_store %arg5[%c0_12, %c0_13], %20 {strides = array<i32>} : memref<8x1xf32, #tpu.memory_space<vmem>>, vector<8x1xf32>,
    return
  }
}

</mosaic_0001>

<llo_original>
// kernel: tpu_custom_call.1
$region0: #{tpu_custom_call.1}
  #allocation0 [shape = 'u32[]', space=smem, size = 0x4, offset = 0x4, fixed_abs, tag = 'smem constant byte address 0x4 - core index']
  #allocation1 [shape = 'u32[144,128]{1,0:T(1,128)}', space=vmem, size = 0x12000, scoped, tag = 'internal scratch']
  #allocation2 [shape = 'f32[1,1]{1,0:T(1,128)S(1)}', space=vmem, size = 0x200, scoped, tag = 'scoped memory for tpu_custom_call.1']
  %s0 = inlined_call_operand.hbm [shape: f32[8,16], index: 0, kind: input, shape index: {}]
  %s1 = inlined_call_operand.hbm [shape: f32[16,32], index: 1, kind: input, shape index: {}]
  %s2 = inlined_call_operand.vmem [shape: f32[1,32], index: 2, kind: input, shape index: {}]
  %s3 = inlined_call_operand.vmem [shape: f32[1,32], index: 3, kind: input, shape index: {}]
  %s4 = inlined_call_operand.<no memory space> [shape: f32[1,1], index: 4, kind: input, shape index: {}]
  %s5 = inlined_call_operand.vmem [shape: f32[8,1], index: 5, kind: output, shape index: {}]
  %s6 = sld [smem:[#allocation0]]
  $region38: #{tpu_custom_call.1} parent=0
    _
  %s8 = ssub.s32 1, %s6
  %s9 = scalar_select 0, %s8, %s6
  %v10 = vstv %s4
  %11 = vst [vmem:[#allocation2] sm:$0x1] %v10
  $region1: #{tpu_custom_call.1} parent=0
    #allocation3 [shape = 'u8[4096]{0}', space=vmem, size = 0x1000, scoped, tag = 'input window, operand 0, single buffered']
    #allocation4 [shape = 's32[1]{0}', space=sflag, size = 0x4, scoped, tag = 'scoped memory for tpu_custom_call.1']
    #allocation5 [shape = 'u8[8192]{0}', space=vmem, size = 0x2000, scoped, tag = 'input window, operand 1, single buffered']
    #allocation6 [shape = 's32[1]{0}', space=sflag, size = 0x4, scoped, tag = 'scoped memory for tpu_custom_call.1']
    %12 = vsyncpa [#allocation4], 0
    %13 = vsyncpa [#allocation6], 0
    // Predicated region
    $region2: #{tpu_custom_call.1} parent=1 // pred_check
      _
    $region3: #{tpu_custom_call.1} parent=1 // pred_check_branch
      %15 = sbr.rel (0) target = $region5
    $region4: #{tpu_custom_call.1} parent=1 // pred_region
      %s17 = ssub.s32 128, 128
      %18 = vsyncadd [#allocation4], %s17
      %s20 = sshll.u32 [#allocation3], 4
      %s21 = int_to_ptr.vmem [resolvable:$true] %s20
      %23 = dma.hbm_to_vmem [thread:$0]  %s0, 128, %s21, [#allocation4]
    $region5: #{tpu_custom_call.1} parent=1 // pred_fallthru
      _
    // Predicated region
    $region6: #{tpu_custom_call.1} parent=1 // pred_check
      _
    $region7: #{tpu_custom_call.1} parent=1 // pred_check_branch
      %25 = sbr.rel (0) target = $region9
    $region8: #{tpu_custom_call.1} parent=1 // pred_region
      %s27 = ssub.s32 256, 256
      %28 = vsyncadd [#allocation6], %s27
      %s29 = sshll.u32 [#allocation5], 4
      %s30 = int_to_ptr.vmem [resolvable:$true] %s29
      %35 = dma.hbm_to_vmem [thread:$0]  %s1, 256, %s30, [#allocation6], 128, 128, 8
    $region9: #{tpu_custom_call.1} parent=1 // pred_fallthru
      _
    // Predicated region
    $region10: #{tpu_custom_call.1} parent=1 // pred_check
      _
    $region11: #{tpu_custom_call.1} parent=1 // pred_check_branch
      %37 = sbr.rel (0) target = $region13
    $region12: #{tpu_custom_call.1} parent=1 // pred_region
      _
    $region13: #{tpu_custom_call.1} parent=1 // pred_fallthru
      _
    // Predicated region
    $region14: #{tpu_custom_call.1} parent=1 // pred_check
      _
    $region15: #{tpu_custom_call.1} parent=1 // pred_check_branch
      %39 = sbr.rel (0) target = $region17
    $region16: #{tpu_custom_call.1} parent=1 // pred_region
      _
    $region17: #{tpu_custom_call.1} parent=1 // pred_fallthru
      _
    // Predicated region
    $region18: #{tpu_custom_call.1} parent=1 // pred_check
      _
    $region19: #{tpu_custom_call.1} parent=1 // pred_check_branch
      %41 = sbr.rel (0) target = $region21
    $region20: #{tpu_custom_call.1} parent=1 // pred_region
      _
    $region21: #{tpu_custom_call.1} parent=1 // pred_fallthru
      _
    // Predicated region
    $region22: #{tpu_custom_call.1} parent=1 // pred_check
      _
    $region23: #{tpu_custom_call.1} parent=1 // pred_check_branch
      %43 = sbr.rel (0) target = $region25
    $region24: #{tpu_custom_call.1} parent=1 // pred_region
      %44 = dma.done [#allocation4], 128
    $region25: #{tpu_custom_call.1} parent=1 // pred_fallthru
      _
    // Predicated region
    $region26: #{tpu_custom_call.1} parent=1 // pred_check
      _
    $region27: #{tpu_custom_call.1} parent=1 // pred_check_branch
      %46 = sbr.rel (0) target = $region29
    $region28: #{tpu_custom_call.1} parent=1 // pred_region
      %47 = dma.done [#allocation6], 256
    $region29: #{tpu_custom_call.1} parent=1 // pred_fallthru
      _
    %v48 = vld [vmem:[#allocation3] sm:$0xff]
    %v49 = vld [vmem:[#allocation5] sm:$0xff]
    %v50 = vld [vmem:[#allocation5 + $0x8] sm:$0xff]
    %v51 = vld [vmem:[%s2] sm:$0x1]
    %v53 = vlaneseq
    %v54 = vshrl.u32 %v53, 7
    %v55 = vsub.s32 0, %v54
    %v56 = vrot.slane %v51, %v55
    %vm58 = vcmask 130048
    %v60 = vsel %vm58, %v48, 0
    %62 = vmatprep.subr.mxu0 0.0
    %63 = vmatpush1.msra.mxu0 %v49
    %64 = vmatprep.subr.mxu0 0.0
    %65 = vmatpush1.msra.mxu0 %v50
    %66 = vmatprep.subr.mxu0 0.0
    %67 = vmatpush1.msra.mxu0 0.0
    %68 = vmatprep.subr.mxu0 0.0
    %69 = vmatpush1.msra.mxu0 0.0
    %70 = vmatprep.subr.mxu0 0.0
    %71 = vmatpush1.msra.mxu0 0.0
    %72 = vmatprep.subr.mxu0 0.0
    %73 = vmatpush1.msra.mxu0 0.0
    %74 = vmatprep.subr.mxu0 0.0
    %75 = vmatpush1.msra.mxu0 0.0
    %76 = vmatprep.subr.mxu0 0.0
    %77 = vmatpush1.msra.mxu0 0.0
    %78 = vmatprep.subr.mxu0 0.0
    %79 = vmatpush1.msra.mxu0 0.0
    %80 = vmatprep.subr.mxu0 0.0
    %81 = vmatpush1.msra.mxu0 0.0
    %82 = vmatprep.subr.mxu0 0.0
    %83 = vmatpush1.msra.mxu0 0.0
    %84 = vmatprep.subr.mxu0 0.0
    %85 = vmatpush1.msra.mxu0 0.0
    %86 = vmatprep.subr.mxu0 0.0
    %87 = vmatpush1.msra.mxu0 0.0
    %88 = vmatprep.subr.mxu0 0.0
    %89 = vmatpush1.msra.mxu0 0.0
    %90 = vmatprep.subr.mxu0 0.0
    %91 = vmatpush1.msra.mxu0 0.0
    %92 = vmatprep.subr.mxu0 0.0
    %93 = vmatpush1.msra.mxu0 0.0
    %94 = vmatprep.subr.mxu0 0.0
    %95 = vmatpush1.msra.mxu0 0.0
    %96 = vmatprep.subr.mxu0 0.0
    %97 = vmatpush1.msra.mxu0 0.0
    %98 = vmatprep.subr.mxu0 0.0
    %99 = vmatpush1.msra.mxu0 0.0
    %100 = vmatprep.subr.mxu0 0.0
    %101 = vmatpush1.msra.mxu0 0.0
    %102 = vmatprep.subr.mxu0 0.0
    %103 = vmatpush1.msra.mxu0 0.0
    %104 = vmatprep.subr.mxu0 0.0
    %105 = vmatpush1.msra.mxu0 0.0
    %106 = vmatprep.subr.mxu0 0.0
    %107 = vmatpush1.msra.mxu0 0.0
    %108 = vmatprep.subr.mxu0 0.0
    %109 = vmatpush1.msra.mxu0 0.0
    %110 = vmatprep.subr.mxu0 0.0
    %111 = vmatpush1.msra.mxu0 0.0
    %112 = vmatprep.subr.mxu0 0.0
    %113 = vmatpush1.msra.mxu0 0.0
    %114 = vmatprep.subr.mxu0 0.0
    %115 = vmatpush1.msra.mxu0 0.0
    %116 = vmatprep.subr.mxu0 0.0
    %117 = vmatpush1.msra.mxu0 0.0
    %118 = vmatprep.subr.mxu0 0.0
    %119 = vmatpush1.msra.mxu0 0.0
    %120 = vmatprep.subr.mxu0 0.0
    %121 = vmatpush1.msra.mxu0 0.0
    %122 = vmatprep.subr.mxu0 0.0
    %123 = vmatpush1.msra.mxu0 0.0
    %124 = vmatprep.subr.mxu0 0.0
    %125 = vmatpush1.msra.mxu0 0.0
    %126 = vmatprep.mubr.f32.mxu0 0.0
    %127 = vmatmul.mubr.f32.gmra.mrb[0].mxu0 %v60
    %v128 = vpop.f32.mrb[0].mxu0
    %v129 = vadd.f32 %v56, %v128
    %v130 = vpop.f32.mrb[0].mxu0
    %131 = vdwg.mxu0
    %v132 = vmax.f32 %v129, 0.0
    %v133 = vld [vmem:[%s3] sm:$0x1]
    %v135 = vlaneseq
    %v136 = vshrl.u32 %v135, 7
    %v137 = vsub.s32 0, %v136
    %v138 = vrot.slane %v133, %v137
    %v140 = vmul.f32 %v132, %v138
    %vm141 = vcmask 261120
    %v142 = vsel %vm141, %v140, 0.0
    %143 = vadd.xlane.f32.xlu0 %v142
    %v144 = vpop.xlane.xlu0 %143
    %v145 = vld [vmem:[#allocation2] sm:$0x1]
    %v147 = vlaneseq
    %v148 = vshrl.u32 %v147, 7
    %v149 = vsub.s32 0, %v148
    %v150 = vrot.slane %v145, %v149
    %v152 = vadd.f32 %v144, %v150
    %v153 = vxor.u32 %v152, 2147483648
    %v154 = vmul.f32 %v153, 1.442695
    %v155 = vpow.pop %v154
    %v156 = vadd.f32 %v155, 1.0
    %v157 = vrcp.pop %v156
    %v158 = vmul.f32 1.0, %v157
    %vm159 = vcmask 7168
    %160 = vst.msk [vmem:[%s5] sm:$0xff] %vm159, %v158
    // Predicated region
    $region30: #{tpu_custom_call.1} parent=1 // pred_check
      _
    $region31: #{tpu_custom_call.1} parent=1 // pred_check_branch
      %162 = sbr.rel (0) target = $region33
    $region32: #{tpu_custom_call.1} parent=1 // pred_region
      _
    $region33: #{tpu_custom_call.1} parent=1 // pred_fallthru
      _
    // Predicated region
    $region34: #{tpu_custom_call.1} parent=1 // pred_check
      _
    $region35: #{tpu_custom_call.1} parent=1 // pred_check_branch
      %164 = sbr.rel (0) target = $region37
    $region36: #{tpu_custom_call.1} parent=1 // pred_region
      _
    $region37: #{tpu_custom_call.1} parent=1 // pred_fallthru
      _
    %165 = vsyncpa [#allocation4], 1
    %166 = vsyncpa [#allocation6], 1

</llo_original>
